<compile_context>
chip_gen: v7x
topology: tpu7x:2x2x1
jax: 0.10.0
libtpu: 0.0.40
codegen_flags: <defaults>
</compile_context>

<pallas_src>
import functools

import jax
import jax.numpy as jnp
from jax.experimental import pallas as pl
from jax.experimental.pallas import tpu as pltpu

DROPOUT_RATE = 0.1  # unused at inference

_LANE = 128
_SUBLANE = 8


def _round_up(x, m):
    return (x + m - 1) // m * m


# --------------------------------------------------------------------------
# Kernels
# --------------------------------------------------------------------------
def _ffn_resident_kernel(x_ref, w1_ref, b1_ref, w2_ref, b2_ref, o_ref):
    # x_ref: (tm, E_pad); w1_ref: (E_pad, H); w2_ref: (H, E_pad)
    cdt = w1_ref.dtype                      # MXU input dtype (f32 or bf16)
    x = x_ref[...].astype(cdt)
    h = jnp.dot(x, w1_ref[...], preferred_element_type=jnp.float32)
    h = jnp.maximum(h + b1_ref[...].astype(jnp.float32), 0.0)        # bias+ReLU in f32
    out = jnp.dot(h.astype(cdt), w2_ref[...], preferred_element_type=jnp.float32)
    out = out + b2_ref[...].astype(jnp.float32)
    o_ref[...] = out.astype(o_ref.dtype)


def _ffn_stream_kernel(x_ref, w1_ref, b1_ref, w2_ref, b2_ref, o_ref, acc_ref):
    # grid = (M tiles, H chunks); accumulate out tile over the hidden chunks.
    j = pl.program_id(1)

    @pl.when(j == 0)
    def _():
        acc_ref[...] = jnp.zeros_like(acc_ref)

    cdt = w1_ref.dtype
    x = x_ref[...].astype(cdt)
    h = jnp.dot(x, w1_ref[...], preferred_element_type=jnp.float32)
    h = jnp.maximum(h + b1_ref[...].astype(jnp.float32), 0.0)
    acc_ref[...] += jnp.dot(h.astype(cdt), w2_ref[...],
                            preferred_element_type=jnp.float32)

    @pl.when(j == pl.num_programs(1) - 1)
    def _():
        o_ref[...] = (acc_ref[...] + b2_ref[...].astype(jnp.float32)
                      ).astype(o_ref.dtype)


# --------------------------------------------------------------------------
# Wrapper
# --------------------------------------------------------------------------
@functools.partial(jax.jit, static_argnames=("tile_m", "tile_h"))
def feed_forward(tokens, w1, b1, w2, b2, *, tile_m=256, tile_h=None):
    """tokens: (B, T, E).  w1:(E,H) b1:(1,H) w2:(H,E) b2:(1,E).  Returns (B,T,E)."""
    B, T, E = tokens.shape
    E_in, H = w1.shape
    assert E_in == E
    M = B * T
    wbytes = jnp.dtype(w1.dtype).itemsize
    xbytes = jnp.dtype(tokens.dtype).itemsize

    # ---- lane-dense E: pad to a multiple of 128 (no-op for real model dims) ----
    E_pad = _round_up(E, _LANE)

    # ---- row tiling: multiple of 8 (f32 sublane), default 256, cdiv + pad M ----
    tm = min(max(tile_m, _SUBLANE), _round_up(M, _SUBLANE))
    tm = _round_up(tm, _SUBLANE)
    M_pad = _round_up(M, tm)
    grid_m = M_pad // tm

    x2d = tokens.reshape(M, E)
    if M_pad != M or E_pad != E:
        x2d = jnp.pad(x2d, ((0, M_pad - M), (0, E_pad - E)))
    if E_pad != E:
        w1 = jnp.pad(w1, ((0, E_pad - E), (0, 0)))
        w2 = jnp.pad(w2, ((0, 0), (0, E_pad - E)))
        b2 = jnp.pad(b2, ((0, 0), (0, E_pad - E)))

    # ---- choose resident-weights vs. H-streamed (v7x / large-E friendly) ----
    if tile_h is None:
        resident_weight_bytes = 2 * E_pad * H * wbytes
        if resident_weight_bytes > 20 * (1 << 20) and H % 512 == 0:
            tile_h = 512
    stream = tile_h is not None and tile_h < H

    cost = pl.CostEstimate(
        flops=4 * M * E * H,
        transcendentals=0,
        bytes_accessed=2 * M * E * xbytes + 2 * E * H * wbytes + (H + E) * 4)

    single = pl.Buffered(1)   # constant block index -> no double buffering

    if not stream:
        vmem_need = (2 * E_pad * H * wbytes        # W1 + W2 (single-buffered)
                     + (H + E_pad) * 4             # biases
                     + 2 * 2 * tm * E_pad * 4      # x / out double-buffered
                     + tm * H * 4)                 # hidden activation
        vmem_limit = int(min(64 * (1 << 20),
                             max(32 * (1 << 20), 3 * vmem_need // 2)))
        out2d = pl.pallas_call(
            _ffn_resident_kernel,
            out_shape=jax.ShapeDtypeStruct((M_pad, E_pad), tokens.dtype),
            grid_spec=pltpu.PrefetchScalarGridSpec(
                num_scalar_prefetch=0,
                grid=(grid_m,),
                in_specs=[
                    pl.BlockSpec((tm, E_pad), lambda i: (i, 0)),
                    pl.BlockSpec((E_pad, H), lambda i: (0, 0), pipeline_mode=single),
                    pl.BlockSpec((1, H), lambda i: (0, 0), pipeline_mode=single),
                    pl.BlockSpec((H, E_pad), lambda i: (0, 0), pipeline_mode=single),
                    pl.BlockSpec((1, E_pad), lambda i: (0, 0), pipeline_mode=single),
                ],
                out_specs=pl.BlockSpec((tm, E_pad), lambda i: (i, 0)),
            ),
            compiler_params=pltpu.CompilerParams(
                dimension_semantics=("parallel",),
                vmem_limit_bytes=vmem_limit),
            cost_estimate=cost,
        )(x2d, w1, b1, w2, b2)
    else:
        th = tile_h
        assert th % _LANE == 0 and H % th == 0, \
            "tile_h must be a multiple of 128 and divide H"
        grid_h = H // th
        vmem_need = (2 * 2 * E_pad * th * wbytes   # W1 / W2 chunks, double-buffered
                     + (H + E_pad) * 4             # biases
                     + 2 * 2 * tm * E_pad * 4      # x / out double-buffered
                     + tm * E_pad * 4              # f32 accumulator
                     + tm * th * 4)                # hidden chunk
        vmem_limit = int(min(64 * (1 << 20),
                             max(32 * (1 << 20), 3 * vmem_need // 2)))
        out2d = pl.pallas_call(
            _ffn_stream_kernel,
            out_shape=jax.ShapeDtypeStruct((M_pad, E_pad), tokens.dtype),
            grid_spec=pltpu.PrefetchScalarGridSpec(
                num_scalar_prefetch=0,
                grid=(grid_m, grid_h),
                in_specs=[
                    pl.BlockSpec((tm, E_pad), lambda i, j: (i, 0)),
                    pl.BlockSpec((E_pad, th), lambda i, j: (0, j)),
                    pl.BlockSpec((1, th), lambda i, j: (0, j)),
                    pl.BlockSpec((th, E_pad), lambda i, j: (j, 0)),
                    pl.BlockSpec((1, E_pad), lambda i, j: (0, 0), pipeline_mode=single),
                ],
                out_specs=pl.BlockSpec((tm, E_pad), lambda i, j: (i, 0)),
                scratch_shapes=[pltpu.VMEM((tm, E_pad), jnp.float32)],
            ),
            compiler_params=pltpu.CompilerParams(
                dimension_semantics=("parallel", "arbitrary"),
                vmem_limit_bytes=vmem_limit),
            cost_estimate=cost,
        )(x2d, w1, b1, w2, b2)

    return out2d[:M, :E].reshape(B, T, E)


# --------------------------------------------------------------------------
# Params / reference
# --------------------------------------------------------------------------
def init_params(key, embedding_size):
    """Deterministic init matching nn.Linear's default U(-1/sqrt(fan_in), +)."""
    E = embedding_size
    H = 4 * E
    k1, k2, k3, k4 = jax.random.split(key, 4)
    bound1 = 1.0 / jnp.sqrt(E)
    bound2 = 1.0 / jnp.sqrt(H)
    # store weights as (in, out) so the kernel does x @ W (torch stores (out, in))
    w1 = jax.random.uniform(k1, (E, H), jnp.float32, -bound1, bound1)
    b1 = jax.random.uniform(k2, (1, H), jnp.float32, -bound1, bound1)
    w2 = jax.random.uniform(k3, (H, E), jnp.float32, -bound2, bound2)
    b2 = jax.random.uniform(k4, (1, E), jnp.float32, -bound2, bound2)
    return w1, b1, w2, b2


def feed_forward_ref(tokens, w1, b1, w2, b2):
    h = jnp.maximum(tokens @ w1 + b1[0], 0.0)
    return h @ w2 + b2[0]


if __name__ == "__main__":
    key = jax.random.PRNGKey(0)
    kx, kp, kx2, kp2 = jax.random.split(key, 4)

    # --- small config: embedding_size=32 (hidden 128), batch=2, seq=8 ---
    B, T, E = 2, 8, 32
    tokens = jax.random.normal(kx, (B, T, E), jnp.float32)
    w1, b1, w2, b2 = init_params(kp, E)

    out = jax.block_until_ready(feed_forward(tokens, w1, b1, w2, b2))
    ref = feed_forward_ref(tokens, w1, b1, w2, b2)
    assert out.shape == (B, T, E)
    assert jnp.allclose(out, ref, atol=1e-4, rtol=1e-4), "resident-path mismatch"

    # --- exercise the H-streamed (v7x / large-E) variant on a second shape ---
    B2, T2, E2 = 2, 8, 64
    tokens2 = jax.random.normal(kx2, (B2, T2, E2), jnp.float32)
    p2 = init_params(kp2, E2)
    out2 = jax.block_until_ready(feed_forward(tokens2, *p2, tile_h=128))
    ref2 = feed_forward_ref(tokens2, *p2)
    assert jnp.allclose(out2, ref2, atol=1e-4, rtol=1e-4), "streamed-path mismatch"

    # --- bf16-weight (MXU-native) variant, f32 accumulation, looser tolerance ---
    out3 = jax.block_until_ready(
        feed_forward(tokens, w1.astype(jnp.bfloat16), b1,
                     w2.astype(jnp.bfloat16), b2))
    assert jnp.allclose(out3, ref, atol=5e-2, rtol=5e-2), "bf16-path mismatch"

    print("KERNEL_OK")
</pallas_src>

<mosaic_0001>
module attributes {stable_mosaic.version = 11 : i64} {
  func.func @_ffn_resident_kernel(%arg0: i32, %arg1: memref<16x128xf32, #tpu.memory_space<vmem>>, %arg2: memref<128x128xf32, #tpu.memory_space<vmem>>, %arg3: memref<1x128xf32, #tpu.memory_space<vmem>>, %arg4: memref<128x128xf32, #tpu.memory_space<vmem>>, %arg5: memref<1x128xf32, #tpu.memory_space<vmem>>, %arg6: memref<16x128xf32, #tpu.memory_space<vmem>>) attributes {dimension_semantics = [#tpu.dimension_semantics<parallel>], iteration_bounds = array<i64: 1>, scalar_prefetch = 0 : i64, scratch_operands = 0 : i64, tpu.core_type = #tpu.core_type<tc>, window_params = [{transform_indices = @transform_0, window_bounds = array<i64: 16, 128>}, {pipeline_mode = #tpu.pipeline_mode<synchronous>, transform_indices = @transform_1, window_bounds = array<i64: 128, 128>}, {pipeline_mode = #tpu.pipeline_mode<synchronous>, transform_indices = @transform_2, window_bounds = array<i64: 1, 128>}, {pipeline_mode = #tpu.pipeline_mode<synchronous>, transform_indices = @transform_3, window_bounds = array<i64: 128, 128>}, {pipeline_mode = #tpu.pipeline_mode<synchronous>, transform_indices = @transform_4, window_bounds = array<i64: 1, 128>}, {transform_indices = @transform_5, window_bounds = array<i64: 16, 128>}]} {
    %c0 = arith.constant 0 : index
    %c0_0 = arith.constant 0 : index
    %0 = vector.load %arg1[%c0, %c0_0] : memref<16x128xf32, #tpu.memory_space<vmem>>, vector<16x128xf32>
    %c0_1 = arith.constant 0 : index
    %c0_2 = arith.constant 0 : index
    %1 = vector.load %arg2[%c0_1, %c0_2] : memref<128x128xf32, #tpu.memory_space<vmem>>, vector<128x128xf32>
    %cst = arith.constant dense<0.000000e+00> : vector<16x128xf32>
    %2 = tpu.matmul %0, %1, %cst {dimension_numbers = #tpu.dot_dimension_numbers<[1], [0], [0], [1], [0, 0, 1, 1], [], []>} : vector<16x128xf32>, vector<128x128xf32>, vector<16x128xf32> -> vector<16x128xf32>
    %c0_3 = arith.constant 0 : index
    %c0_4 = arith.constant 0 : index
    %3 = vector.load %arg3[%c0_3, %c0_4] : memref<1x128xf32, #tpu.memory_space<vmem>>, vector<1x128xf32>
    %4 = vector.broadcast %3 : vector<1x128xf32> to vector<16x128xf32>
    %5 = arith.addf %2, %4 : vector<16x128xf32>
    %cst_5 = arith.constant 0.000000e+00 : f32
    %6 = vector.broadcast %cst_5 : f32 to vector<16x128xf32>
    %7 = arith.maximumf %5, %6 : vector<16x128xf32>
    %c0_6 = arith.constant 0 : index
    %c0_7 = arith.constant 0 : index
    %8 = vector.load %arg4[%c0_6, %c0_7] : memref<128x128xf32, #tpu.memory_space<vmem>>, vector<128x128xf32>
    %cst_8 = arith.constant dense<0.000000e+00> : vector<16x128xf32>
    %9 = tpu.matmul %7, %8, %cst_8 {dimension_numbers = #tpu.dot_dimension_numbers<[1], [0], [0], [1], [0, 0, 1, 1], [], []>} : vector<16x128xf32>, vector<128x128xf32>, vector<16x128xf32> -> vector<16x128xf32>
    %c0_9 = arith.constant 0 : index
    %c0_10 = arith.constant 0 : index
    %10 = vector.load %arg5[%c0_9, %c0_10] : memref<1x128xf32, #tpu.memory_space<vmem>>, vector<1x128xf32>
    %11 = vector.broadcast %10 : vector<1x128xf32> to vector<16x128xf32>
    %12 = arith.addf %9, %11 : vector<16x128xf32>
    %c0_11 = arith.constant 0 : index
    %c0_12 = arith.constant 0 : index
    %13 = vector.load %arg6[%c0_11, %c0_12] : memref<16x128xf32, #tpu.memory_space<vmem>>, vector<16x128xf32>
    tpu.vector_store %arg6[%c0_11, %c0_12], %12 {strides = array<i32>} : memref<16x128xf32, #tpu.memory_space<vmem>>, vector<16x128xf32>,
    return
  }
  func.func @transform_0(%arg0: i32) -> (i32, i32) {
    %c0_i32 = arith.constant 0 : i32
    %c0_i32_0 = arith.constant 0 : i32
    return %arg0, %c0_i32 : i32, i32
  }
  func.func @transform_1(%arg0: i32) -> (i32, i32) {
    %c0_i32 = arith.constant 0 : i32
    %c0_i32_0 = arith.constant 0 : i32
    %c0_i32_1 = arith.constant 0 : i32
    return %c0_i32, %c0_i32_0 : i32, i32
  }
  func.func @transform_2(%arg0: i32) -> (i32, i32) {
    %c0_i32 = arith.constant 0 : i32
    %c0_i32_0 = arith.constant 0 : i32
    %c0_i32_1 = arith.constant 0 : i32
    return %c0_i32, %c0_i32_0 : i32, i32
  }
  func.func @transform_3(%arg0: i32) -> (i32, i32) {
    %c0_i32 = arith.constant 0 : i32
    %c0_i32_0 = arith.constant 0 : i32
    %c0_i32_1 = arith.constant 0 : i32
    return %c0_i32, %c0_i32_0 : i32, i32
  }
  func.func @transform_4(%arg0: i32) -> (i32, i32) {
    %c0_i32 = arith.constant 0 : i32
    %c0_i32_0 = arith.constant 0 : i32
    %c0_i32_1 = arith.constant 0 : i32
    return %c0_i32, %c0_i32_0 : i32, i32
  }
  func.func @transform_5(%arg0: i32) -> (i32, i32) {
    %c0_i32 = arith.constant 0 : i32
    %c0_i32_0 = arith.constant 0 : i32
    return %arg0, %c0_i32 : i32, i32
  }
}

</mosaic_0001>

<llo_original>
// kernel: feed_forward.1
$region0: #{feed_forward.1}
  #allocation0 [shape = 'u32[]', space=smem, size = 0x4, offset = 0x4, fixed_abs, tag = 'smem constant byte address 0x4 - core index']
  #allocation1 [shape = 'u32[144,128]{1,0:T(1,128)}', space=vmem, size = 0x12000, scoped, tag = 'internal scratch']
  %s0 = inlined_call_operand.vmem [shape: f32[16,128], index: 0, kind: input, shape index: {}]
  %s1 = inlined_call_operand.vmem [shape: f32[128,128], index: 1, kind: input, shape index: {}]
  %s2 = inlined_call_operand.vmem [shape: f32[1,128], index: 2, kind: input, shape index: {}]
  %s3 = inlined_call_operand.vmem [shape: f32[128,128], index: 3, kind: input, shape index: {}]
  %s4 = inlined_call_operand.vmem [shape: f32[1,128], index: 4, kind: input, shape index: {}]
  %s5 = inlined_call_operand.vmem [shape: f32[16,128], index: 5, kind: output, shape index: {}]
  %s6 = sld [smem:[#allocation0]]
  $region30: #{feed_forward.1} parent=0
    _
  %s8 = ssub.s32 1, %s6
  %s9 = scalar_select 0, %s8, %s6
  // Predicated region
  $region2: #{feed_forward.1} parent=0 // pred_check
    _
  $region3: #{feed_forward.1} parent=0 // pred_check_branch
    %11 = sbr.rel (0) target = $region5
  $region4: #{feed_forward.1} parent=0 // pred_region
    _
  $region5: #{feed_forward.1} parent=0 // pred_fallthru
    _
  // Predicated region
  $region6: #{feed_forward.1} parent=0 // pred_check
    _
  $region7: #{feed_forward.1} parent=0 // pred_check_branch
    %13 = sbr.rel (0) target = $region9
  $region8: #{feed_forward.1} parent=0 // pred_region
    _
  $region9: #{feed_forward.1} parent=0 // pred_fallthru
    _
  // Predicated region
  $region10: #{feed_forward.1} parent=0 // pred_check
    _
  $region11: #{feed_forward.1} parent=0 // pred_check_branch
    %15 = sbr.rel (0) target = $region13
  $region12: #{feed_forward.1} parent=0 // pred_region
    _
  $region13: #{feed_forward.1} parent=0 // pred_fallthru
    _
  // Predicated region
  $region14: #{feed_forward.1} parent=0 // pred_check
    _
  $region15: #{feed_forward.1} parent=0 // pred_check_branch
    %17 = sbr.rel (0) target = $region17
  $region16: #{feed_forward.1} parent=0 // pred_region
    _
  $region17: #{feed_forward.1} parent=0 // pred_fallthru
    _
  // Predicated region
  $region18: #{feed_forward.1} parent=0 // pred_check
    _
  $region19: #{feed_forward.1} parent=0 // pred_check_branch
    %19 = sbr.rel (0) target = $region21
  $region20: #{feed_forward.1} parent=0 // pred_region
    _
  $region21: #{feed_forward.1} parent=0 // pred_fallthru
    _
  %v20 = vld [vmem:[%s0] sm:$0xff]
  %v21 = vld [vmem:[%s0 + $0x8] sm:$0xff]
  %v22 = vld [vmem:[%s1] sm:$0xff]
  %v23 = vld [vmem:[%s1 + $0x8] sm:$0xff]
  %v24 = vld [vmem:[%s1 + $0x10] sm:$0xff]
  %v25 = vld [vmem:[%s1 + $0x18] sm:$0xff]
  %v26 = vld [vmem:[%s1 + $0x20] sm:$0xff]
  %v27 = vld [vmem:[%s1 + $0x28] sm:$0xff]
  %v28 = vld [vmem:[%s1 + $0x30] sm:$0xff]
  %v29 = vld [vmem:[%s1 + $0x38] sm:$0xff]
  %v30 = vld [vmem:[%s1 + $0x40] sm:$0xff]
  %v31 = vld [vmem:[%s1 + $0x48] sm:$0xff]
  %v32 = vld [vmem:[%s1 + $0x50] sm:$0xff]
  %v33 = vld [vmem:[%s1 + $0x58] sm:$0xff]
  %v34 = vld [vmem:[%s1 + $0x60] sm:$0xff]
  %v35 = vld [vmem:[%s1 + $0x68] sm:$0xff]
  %v36 = vld [vmem:[%s1 + $0x70] sm:$0xff]
  %v37 = vld [vmem:[%s1 + $0x78] sm:$0xff]
  %v38 = vld [vmem:[%s2] sm:$0x1]
  %v40 = vlaneseq
  %v41 = vshrl.u32 %v40, 7
  %v42 = vsub.s32 0, %v41
  %v43 = vrot.slane %v38, %v42
  %45 = vmatprep.subr.mxu0 0.0
  %46 = vmatpush1.msra.mxu0 %v22
  %47 = vmatprep.subr.mxu0 0.0
  %48 = vmatpush1.msra.mxu0 %v23
  %49 = vmatprep.subr.mxu0 0.0
  %50 = vmatpush1.msra.mxu0 %v24
  %51 = vmatprep.subr.mxu0 0.0
  %52 = vmatpush1.msra.mxu0 %v25
  %53 = vmatprep.subr.mxu0 0.0
  %54 = vmatpush1.msra.mxu0 %v26
  %55 = vmatprep.subr.mxu0 0.0
  %56 = vmatpush1.msra.mxu0 %v27
  %57 = vmatprep.subr.mxu0 0.0
  %58 = vmatpush1.msra.mxu0 %v28
  %59 = vmatprep.subr.mxu0 0.0
  %60 = vmatpush1.msra.mxu0 %v29
  %61 = vmatprep.subr.mxu0 0.0
  %62 = vmatpush1.msra.mxu0 %v30
  %63 = vmatprep.subr.mxu0 0.0
  %64 = vmatpush1.msra.mxu0 %v31
  %65 = vmatprep.subr.mxu0 0.0
  %66 = vmatpush1.msra.mxu0 %v32
  %67 = vmatprep.subr.mxu0 0.0
  %68 = vmatpush1.msra.mxu0 %v33
  %69 = vmatprep.subr.mxu0 0.0
  %70 = vmatpush1.msra.mxu0 %v34
  %71 = vmatprep.subr.mxu0 0.0
  %72 = vmatpush1.msra.mxu0 %v35
  %73 = vmatprep.subr.mxu0 0.0
  %74 = vmatpush1.msra.mxu0 %v36
  %75 = vmatprep.subr.mxu0 0.0
  %76 = vmatpush1.msra.mxu0 %v37
  %77 = vmatprep.subr.mxu0 0.0
  %78 = vmatpush1.msra.mxu0 0.0
  %79 = vmatprep.subr.mxu0 0.0
  %80 = vmatpush1.msra.mxu0 0.0
  %81 = vmatprep.subr.mxu0 0.0
  %82 = vmatpush1.msra.mxu0 0.0
  %83 = vmatprep.subr.mxu0 0.0
  %84 = vmatpush1.msra.mxu0 0.0
  %85 = vmatprep.subr.mxu0 0.0
  %86 = vmatpush1.msra.mxu0 0.0
  %87 = vmatprep.subr.mxu0 0.0
  %88 = vmatpush1.msra.mxu0 0.0
  %89 = vmatprep.subr.mxu0 0.0
  %90 = vmatpush1.msra.mxu0 0.0
  %91 = vmatprep.subr.mxu0 0.0
  %92 = vmatpush1.msra.mxu0 0.0
  %93 = vmatprep.subr.mxu0 0.0
  %94 = vmatpush1.msra.mxu0 0.0
  %95 = vmatprep.subr.mxu0 0.0
  %96 = vmatpush1.msra.mxu0 0.0
  %97 = vmatprep.subr.mxu0 0.0
  %98 = vmatpush1.msra.mxu0 0.0
  %99 = vmatprep.subr.mxu0 0.0
  %100 = vmatpush1.msra.mxu0 0.0
  %101 = vmatprep.subr.mxu0 0.0
  %102 = vmatpush1.msra.mxu0 0.0
  %103 = vmatprep.subr.mxu0 0.0
  %104 = vmatpush1.msra.mxu0 0.0
  %105 = vmatprep.subr.mxu0 0.0
  %106 = vmatpush1.msra.mxu0 0.0
  %107 = vmatprep.subr.mxu0 0.0
  %108 = vmatpush1.msra.mxu0 0.0
  %109 = vmatprep.mubr.f32.mxu0 0.0
  %110 = vmatmul.mubr.f32.gmra.mrb[0].mxu0 %v20
  %v111 = vpop.f32.mrb[0].mxu0
  %v112 = vadd.f32 %v43, %v111
  %v113 = vpop.f32.mrb[0].mxu0
  %114 = vmatprep.mubr.f32.mxu0 0.0
  %115 = vmatmul.mubr.f32.gmra.mrb[0].mxu0 %v21
  %v116 = vpop.f32.mrb[0].mxu0
  %v117 = vadd.f32 %v43, %v116
  %v118 = vpop.f32.mrb[0].mxu0
  %119 = vdwg.mxu0
  %v120 = vmax.f32 %v112, 0.0
  %v121 = vmax.f32 %v117, 0.0
  %v122 = vld [vmem:[%s3] sm:$0xff]
  %v123 = vld [vmem:[%s3 + $0x8] sm:$0xff]
  %v124 = vld [vmem:[%s3 + $0x10] sm:$0xff]
  %v125 = vld [vmem:[%s3 + $0x18] sm:$0xff]
  %v126 = vld [vmem:[%s3 + $0x20] sm:$0xff]
  %v127 = vld [vmem:[%s3 + $0x28] sm:$0xff]
  %v128 = vld [vmem:[%s3 + $0x30] sm:$0xff]
  %v129 = vld [vmem:[%s3 + $0x38] sm:$0xff]
  %v130 = vld [vmem:[%s3 + $0x40] sm:$0xff]
  %v131 = vld [vmem:[%s3 + $0x48] sm:$0xff]
  %v132 = vld [vmem:[%s3 + $0x50] sm:$0xff]
  %v133 = vld [vmem:[%s3 + $0x58] sm:$0xff]
  %v134 = vld [vmem:[%s3 + $0x60] sm:$0xff]
  %v135 = vld [vmem:[%s3 + $0x68] sm:$0xff]
  %v136 = vld [vmem:[%s3 + $0x70] sm:$0xff]
  %v137 = vld [vmem:[%s3 + $0x78] sm:$0xff]
  %v138 = vld [vmem:[%s4] sm:$0x1]
  %v140 = vlaneseq
  %v141 = vshrl.u32 %v140, 7
  %v142 = vsub.s32 0, %v141
  %v143 = vrot.slane %v138, %v142
  %145 = vmatprep.subr.mxu0 0.0
  %146 = vmatpush1.msra.mxu0 %v122
  %147 = vmatprep.subr.mxu0 0.0
  %148 = vmatpush1.msra.mxu0 %v123
  %149 = vmatprep.subr.mxu0 0.0
  %150 = vmatpush1.msra.mxu0 %v124
  %151 = vmatprep.subr.mxu0 0.0
  %152 = vmatpush1.msra.mxu0 %v125
  %153 = vmatprep.subr.mxu0 0.0
  %154 = vmatpush1.msra.mxu0 %v126
  %155 = vmatprep.subr.mxu0 0.0
  %156 = vmatpush1.msra.mxu0 %v127
  %157 = vmatprep.subr.mxu0 0.0
  %158 = vmatpush1.msra.mxu0 %v128
  %159 = vmatprep.subr.mxu0 0.0
  %160 = vmatpush1.msra.mxu0 %v129
  %161 = vmatprep.subr.mxu0 0.0
  %162 = vmatpush1.msra.mxu0 %v130
  %163 = vmatprep.subr.mxu0 0.0
  %164 = vmatpush1.msra.mxu0 %v131
  %165 = vmatprep.subr.mxu0 0.0
  %166 = vmatpush1.msra.mxu0 %v132
  %167 = vmatprep.subr.mxu0 0.0
  %168 = vmatpush1.msra.mxu0 %v133
  %169 = vmatprep.subr.mxu0 0.0
  %170 = vmatpush1.msra.mxu0 %v134
  %171 = vmatprep.subr.mxu0 0.0
  %172 = vmatpush1.msra.mxu0 %v135
  %173 = vmatprep.subr.mxu0 0.0
  %174 = vmatpush1.msra.mxu0 %v136
  %175 = vmatprep.subr.mxu0 0.0
  %176 = vmatpush1.msra.mxu0 %v137
  %177 = vmatprep.subr.mxu0 0.0
  %178 = vmatpush1.msra.mxu0 0.0
  %179 = vmatprep.subr.mxu0 0.0
  %180 = vmatpush1.msra.mxu0 0.0
  %181 = vmatprep.subr.mxu0 0.0
  %182 = vmatpush1.msra.mxu0 0.0
  %183 = vmatprep.subr.mxu0 0.0
  %184 = vmatpush1.msra.mxu0 0.0
  %185 = vmatprep.subr.mxu0 0.0
  %186 = vmatpush1.msra.mxu0 0.0
  %187 = vmatprep.subr.mxu0 0.0
  %188 = vmatpush1.msra.mxu0 0.0
  %189 = vmatprep.subr.mxu0 0.0
  %190 = vmatpush1.msra.mxu0 0.0
  %191 = vmatprep.subr.mxu0 0.0
  %192 = vmatpush1.msra.mxu0 0.0
  %193 = vmatprep.subr.mxu0 0.0
  %194 = vmatpush1.msra.mxu0 0.0
  %195 = vmatprep.subr.mxu0 0.0
  %196 = vmatpush1.msra.mxu0 0.0
  %197 = vmatprep.subr.mxu0 0.0
  %198 = vmatpush1.msra.mxu0 0.0
  %199 = vmatprep.subr.mxu0 0.0
  %200 = vmatpush1.msra.mxu0 0.0
  %201 = vmatprep.subr.mxu0 0.0
  %202 = vmatpush1.msra.mxu0 0.0
  %203 = vmatprep.subr.mxu0 0.0
  %204 = vmatpush1.msra.mxu0 0.0
  %205 = vmatprep.subr.mxu0 0.0
  %206 = vmatpush1.msra.mxu0 0.0
  %207 = vmatprep.subr.mxu0 0.0
  %208 = vmatpush1.msra.mxu0 0.0
  %209 = vmatprep.mubr.f32.mxu0 0.0
  %210 = vmatmul.mubr.f32.gmra.mrb[0].mxu0 %v120
  %v211 = vpop.f32.mrb[0].mxu0
  %v212 = vadd.f32 %v143, %v211
  %v213 = vpop.f32.mrb[0].mxu0
  %214 = vmatprep.mubr.f32.mxu0 0.0
  %215 = vmatmul.mubr.f32.gmra.mrb[0].mxu0 %v121
  %v216 = vpop.f32.mrb[0].mxu0
  %v217 = vadd.f32 %v143, %v216
  %v218 = vpop.f32.mrb[0].mxu0
  %219 = vdwg.mxu0
  %220 = vst [vmem:[%s5] sm:$0xff] %v212
  %221 = vst [vmem:[%s5 + $0x8] sm:$0xff] %v217
  // Predicated region
  $region22: #{feed_forward.1} parent=0 // pred_check
    _
  $region23: #{feed_forward.1} parent=0 // pred_check_branch
    %223 = sbr.rel (0) target = $region25
  $region24: #{feed_forward.1} parent=0 // pred_region
    _
  $region25: #{feed_forward.1} parent=0 // pred_fallthru
    _
  // Predicated region
  $region26: #{feed_forward.1} parent=0 // pred_check
    _
  $region27: #{feed_forward.1} parent=0 // pred_check_branch
    %225 = sbr.rel (0) target = $region29
  $region28: #{feed_forward.1} parent=0 // pred_region
    _
  $region29: #{feed_forward.1} parent=0 // pred_fallthru
    _

</llo_original>
